<compile_context>
chip_gen: v5e
topology: v5e:2x2
jax: 0.10.0
libtpu: 0.0.40
codegen_flags: <defaults>
</compile_context>

<pallas_src>
import functools
import math

import jax
import jax.numpy as jnp
from jax.experimental import pallas as pl
from jax.experimental.pallas import tpu as pltpu


_LANE = 128
_SUBLANE = 8


def _round_up(x, m):
    return (x + m - 1) // m * m


def _vmem_capacity_bytes():
    """Best-effort per-core VMEM capacity; conservative default = 64 MiB (v7x)."""
    try:
        return int(pltpu.get_tpu_info().vmem_capacity_bytes)
    except Exception:
        return 64 * 1024 * 1024


def _choose_tm(m, max_tm):
    """Row-tile size: single zero-waste tile when it fits, else min padding."""
    m = max(m, 1)
    if m <= max_tm:
        return _round_up(m, _SUBLANE)
    candidates = [c for c in (256, 384, 512, 640, 768, 896, 1024) if c <= max_tm]
    best_tm, best_key = None, None
    for c in candidates:
        waste = _round_up(m, c) - m
        key = (waste, -c)          # minimize waste, tie-break larger tile
        if best_key is None or key < best_key:
            best_key, best_tm = key, c
    return best_tm


def _apply_activation(y, name):
    if name is None or name == "none":
        return y
    if name == "relu":
        return jnp.maximum(y, 0.0)
    if name == "sigmoid":
        return jax.nn.sigmoid(y)
    if name == "tanh":
        return jnp.tanh(y)
    if name == "gelu":
        # PyTorch nn.GELU default is the exact (erf-based) GELU.  If exactness
        # can be relaxed, approximate=True (tanh) rides the otherwise-idle EUP.
        return jax.nn.gelu(y, approximate=False)
    raise ValueError(f'activation "{name}" is invalid.')


def _fused_mlp_kernel(*refs, activations, input_activation):
    """Fused MLP on one (tm, k0) row tile.

    refs = (x_ref, w0_ref, b0_ref, w1_ref, b1_ref, ..., o_ref).
    The per-layer intermediate stays on chip between layers.
    """
    num_layers = len(activations)
    x_ref = refs[0]
    o_ref = refs[-1]
    wb = refs[1:-1]
    assert len(wb) == 2 * num_layers

    # input_dropout(p=0) is identity.  When there is no input activation,
    # skip the f32 round trip and feed x straight to the first matmul.
    x = x_ref[...]
    if input_activation is None or input_activation == "none":
        h = x
    else:
        h = _apply_activation(x.astype(jnp.float32), input_activation)

    for li in range(num_layers):
        w_ref = wb[2 * li]
        b_ref = wb[2 * li + 1]
        # MXU matmul in the weights' dtype (f32 or bf16), f32 accumulation.
        y = jnp.dot(h.astype(w_ref.dtype), w_ref[...],
                    preferred_element_type=jnp.float32)
        # Bias add + activation in f32 (VPU/EUP path; safe on v5e too).
        y = y + b_ref[...].astype(jnp.float32)
        h = _apply_activation(y, activations[li])

    o_ref[...] = h.astype(o_ref.dtype)


def prepare_params(params, compute_dtype=jnp.float32):
    """Pad + cast the weights/biases ONCE (call outside the jitted forward).

    params: list of (w, b), w shaped (in_dim, out_dim), b shaped (out_dim,).
    compute_dtype: dtype fed to the MXU.  bf16 is recommended on v5e/v6e/v7x
      (bias/activation math stays f32 inside the kernel).

    Returns (w_pads, b_pads): tuples of padded arrays.
      * layer 0 weight keeps its K dim unpadded (matches x, which is not
        padded in K in HBM); its N dim is padded to a multiple of 128.
      * subsequent weights have K padded to the previous layer's padded N
        (zero rows annihilate the padded intermediate columns) and N padded
        to a multiple of 128.  Biases are kept in f32, shape (1, n_pad).
    """
    n_outs = [int(w.shape[1]) for (w, _) in params]
    k0 = int(params[0][0].shape[0])
    n_pads = [_round_up(n, _LANE) for n in n_outs]
    k_pads = [k0] + n_pads[:-1]

    w_pads, b_pads = [], []
    for (w, b), kp, npad in zip(params, k_pads, n_pads):
        k, n = w.shape
        w_p = jnp.zeros((kp, npad), compute_dtype).at[:k, :n].set(
            w.astype(compute_dtype))
        b_p = jnp.zeros((1, npad), jnp.float32).at[:, :n].set(
            b.reshape(1, n).astype(jnp.float32))
        w_pads.append(w_p)
        b_pads.append(b_p)
    return tuple(w_pads), tuple(b_pads)


@functools.partial(
    jax.jit,
    static_argnames=("activations", "out_dim", "input_activation", "tm"))
def feedforward_forward(x, w_pads, b_pads, *, activations, out_dim,
                        input_activation=None, tm=None):
    """Mirrors FeedForward.forward with dropout p=0 (identity).

    x: (..., input_dim), any float dtype (cast to the MXU dtype in-kernel).
    w_pads, b_pads: output of prepare_params (padded, already in compute dtype).
    activations: tuple of activation names, one per layer (static).
    out_dim: unpadded output dim of the last layer (static).
    """
    activations = tuple(activations)
    num_layers = len(activations)
    assert len(w_pads) == num_layers and len(b_pads) == num_layers

    lead_shape = x.shape[:-1]
    k0 = x.shape[-1]
    assert w_pads[0].shape[0] == k0, "x last dim must match first weight K"
    m = int(math.prod(lead_shape)) if lead_shape else 1
    x2 = x.reshape(m, k0)
    out_dtype = x.dtype

    n_pads = [int(w.shape[1]) for w in w_pads]
    n_last_pad = n_pads[-1]
    compute_dtype = w_pads[0].dtype

    # --- generation-aware row tiling ---
    vmem_cap = _vmem_capacity_bytes()
    max_tm = 1024 if vmem_cap >= 100 * 1024 * 1024 else 512
    if tm is None:
        tm = _choose_tm(m, max_tm)
    m_pad = _round_up(max(m, 1), tm)

    # Row-pad only when needed; no K padding and no dtype cast of x in HBM.
    if m_pad != m:
        x2 = jnp.zeros((m_pad, k0), x.dtype).at[:m].set(x2)

    in_specs = [pl.BlockSpec((tm, k0), lambda i: (i, 0))]
    flat_wb = []
    for w_p, b_p in zip(w_pads, b_pads):
        flat_wb += [w_p, b_p]
        # Constant block index + single-buffered: weights stay VMEM-resident
        # across the grid without a second (useless) pipeline buffer.
        in_specs.append(pl.BlockSpec(w_p.shape, lambda i: (0, 0),
                                     pipeline_mode=pl.Buffered(1)))
        in_specs.append(pl.BlockSpec(b_p.shape, lambda i: (0, 0),
                                     pipeline_mode=pl.Buffered(1)))
    out_spec = pl.BlockSpec((tm, n_last_pad), lambda i: (i, 0))

    kernel = functools.partial(_fused_mlp_kernel,
                               activations=activations,
                               input_activation=input_activation)

    # Tightened VMEM estimate: single-buffered weights/biases, double-buffered
    # x/out tiles, f32 intermediate + its compute-dtype copy fed to the MXU.
    cbytes = jnp.dtype(compute_dtype).itemsize
    xbytes = jnp.dtype(x.dtype).itemsize
    obytes = jnp.dtype(out_dtype).itemsize
    max_np = max(n_pads)
    weight_bytes = sum(w.shape[0] * w.shape[1] * cbytes + b.shape[1] * 4
                       for w, b in zip(w_pads, b_pads))
    tile_bytes = 2 * tm * k0 * xbytes + 2 * tm * n_last_pad * obytes
    interm_bytes = tm * max_np * (4 + cbytes)
    vmem_est = weight_bytes + tile_bytes + interm_bytes
    # Leave headroom below physical VMEM (esp. v7x: 64 MiB per TensorCore).
    vmem_limit = int(min(int(0.85 * vmem_cap),
                         max(int(1.5 * vmem_est), 16 * 1024 * 1024)))

    out_pad = pl.pallas_call(
        kernel,
        out_shape=jax.ShapeDtypeStruct((m_pad, n_last_pad), out_dtype),
        grid=(m_pad // tm,),
        in_specs=in_specs,
        out_specs=out_spec,
        compiler_params=pltpu.CompilerParams(
            dimension_semantics=("parallel",),
            vmem_limit_bytes=vmem_limit,
        ),
    )(x2, *flat_wb)

    out = out_pad[:m, :out_dim]
    return out.reshape(*lead_shape, out_dim)


def make_params(key, input_dim, hidden_dims):
    """Deterministic init matching FeedForward.initialize_weights(mean=0,std=1):
    weights ~ N(0, 1), biases = 0."""
    params = []
    in_dims = [input_dim] + hidden_dims[:-1]
    for d_in, d_out in zip(in_dims, hidden_dims):
        key, sub = jax.random.split(key)
        w = jax.random.normal(sub, (d_in, d_out), dtype=jnp.float32)
        b = jnp.zeros((d_out,), dtype=jnp.float32)
        params.append((w, b))
    return params


def _reference(x, params, activations, input_activation=None,
               compute_dtype=jnp.float32):
    out = x.reshape(-1, x.shape[-1]).astype(jnp.float32)
    out = _apply_activation(out, input_activation)
    for (w, b), act in zip(params, activations):
        y = jnp.dot(out.astype(compute_dtype), w.astype(compute_dtype),
                    preferred_element_type=jnp.float32)
        y = y + b.astype(jnp.float32)
        out = _apply_activation(y, act)
    return out.reshape(*x.shape[:-1], out.shape[-1]).astype(x.dtype)


if __name__ == "__main__":
    # Module configuration (synthetic, deterministic):
    #   FeedForward(input_dim=32, num_layers=2, hidden_dims=[64, 32],
    #               activations=['relu', 'tanh'], dropout=0, bias=True)
    input_dim = 32
    hidden_dims = [64, 32]
    activations = ("relu", "tanh")

    key = jax.random.PRNGKey(0)
    kx, kp, kx2 = jax.random.split(key, 3)
    x = jax.random.normal(kx, (2, 8, input_dim), dtype=jnp.float32)
    params = make_params(kp, input_dim, hidden_dims)

    # f32 compute path: matches the PyTorch module semantics exactly.
    w_f32, b_f32 = prepare_params(params, jnp.float32)     # pad/cast ONCE
    out = feedforward_forward(x, w_f32, b_f32, activations=activations,
                              out_dim=hidden_dims[-1])
    out = jax.block_until_ready(out)
    ref = _reference(x, params, activations)
    assert out.shape == (2, 8, hidden_dims[-1])
    assert jnp.allclose(out, ref, atol=1e-4, rtol=1e-4), float(
        jnp.max(jnp.abs(out - ref)))

    # bf16 MXU-operand fast path (recommended on v5e/v6e/v7x) + multi-step
    # grid over M (tm=128 forces 3 grid steps on the padded 384 rows).
    w_bf16, b_bf16 = prepare_params(params, jnp.bfloat16)  # pad/cast ONCE
    x2 = jax.random.normal(kx2, (3, 100, input_dim), dtype=jnp.float32)
    out2 = feedforward_forward(x2, w_bf16, b_bf16, activations=activations,
                               out_dim=hidden_dims[-1], tm=128)
    out2 = jax.block_until_ready(out2)
    ref2 = _reference(x2, params, activations, compute_dtype=jnp.bfloat16)
    assert out2.shape == (3, 100, hidden_dims[-1])
    assert jnp.allclose(out2, ref2, atol=1e-2, rtol=1e-2), float(
        jnp.max(jnp.abs(out2 - ref2)))

    print("KERNEL_OK")
</pallas_src>

<mosaic_0001>
module attributes {stable_mosaic.version = 11 : i64} {
  func.func @_fused_mlp_kernel(%arg0: i32, %arg1: memref<16x32xf32, #tpu.memory_space<vmem>>, %arg2: memref<32x128xf32, #tpu.memory_space<vmem>>, %arg3: memref<1x128xf32, #tpu.memory_space<vmem>>, %arg4: memref<128x128xf32, #tpu.memory_space<vmem>>, %arg5: memref<1x128xf32, #tpu.memory_space<vmem>>, %arg6: memref<16x128xf32, #tpu.memory_space<vmem>>) attributes {dimension_semantics = [#tpu.dimension_semantics<parallel>], iteration_bounds = array<i64: 1>, scalar_prefetch = 0 : i64, scratch_operands = 0 : i64, tpu.core_type = #tpu.core_type<tc>, window_params = [{transform_indices = @transform_0, window_bounds = array<i64: 16, 32>}, {pipeline_mode = #tpu.pipeline_mode<synchronous>, transform_indices = @transform_1, window_bounds = array<i64: 32, 128>}, {pipeline_mode = #tpu.pipeline_mode<synchronous>, transform_indices = @transform_2, window_bounds = array<i64: 1, 128>}, {pipeline_mode = #tpu.pipeline_mode<synchronous>, transform_indices = @transform_3, window_bounds = array<i64: 128, 128>}, {pipeline_mode = #tpu.pipeline_mode<synchronous>, transform_indices = @transform_4, window_bounds = array<i64: 1, 128>}, {transform_indices = @transform_5, window_bounds = array<i64: 16, 128>}]} {
    %c0 = arith.constant 0 : index
    %c0_0 = arith.constant 0 : index
    %0 = vector.load %arg1[%c0, %c0_0] : memref<16x32xf32, #tpu.memory_space<vmem>>, vector<16x32xf32>
    %c0_1 = arith.constant 0 : index
    %c0_2 = arith.constant 0 : index
    %1 = vector.load %arg2[%c0_1, %c0_2] : memref<32x128xf32, #tpu.memory_space<vmem>>, vector<32x128xf32>
    %cst = arith.constant dense<0.000000e+00> : vector<16x128xf32>
    %2 = tpu.matmul %0, %1, %cst {dimension_numbers = #tpu.dot_dimension_numbers<[1], [0], [0], [1], [0, 0, 1, 1], [], []>} : vector<16x32xf32>, vector<32x128xf32>, vector<16x128xf32> -> vector<16x128xf32>
    %c0_3 = arith.constant 0 : index
    %c0_4 = arith.constant 0 : index
    %3 = vector.load %arg3[%c0_3, %c0_4] : memref<1x128xf32, #tpu.memory_space<vmem>>, vector<1x128xf32>
    %4 = vector.broadcast %3 : vector<1x128xf32> to vector<16x128xf32>
    %5 = arith.addf %2, %4 : vector<16x128xf32>
    %cst_5 = arith.constant 0.000000e+00 : f32
    %6 = vector.broadcast %cst_5 : f32 to vector<16x128xf32>
    %7 = arith.maximumf %5, %6 : vector<16x128xf32>
    %c0_6 = arith.constant 0 : index
    %c0_7 = arith.constant 0 : index
    %8 = vector.load %arg4[%c0_6, %c0_7] : memref<128x128xf32, #tpu.memory_space<vmem>>, vector<128x128xf32>
    %cst_8 = arith.constant dense<0.000000e+00> : vector<16x128xf32>
    %9 = tpu.matmul %7, %8, %cst_8 {dimension_numbers = #tpu.dot_dimension_numbers<[1], [0], [0], [1], [0, 0, 1, 1], [], []>} : vector<16x128xf32>, vector<128x128xf32>, vector<16x128xf32> -> vector<16x128xf32>
    %c0_9 = arith.constant 0 : index
    %c0_10 = arith.constant 0 : index
    %10 = vector.load %arg5[%c0_9, %c0_10] : memref<1x128xf32, #tpu.memory_space<vmem>>, vector<1x128xf32>
    %11 = vector.broadcast %10 : vector<1x128xf32> to vector<16x128xf32>
    %12 = arith.addf %9, %11 : vector<16x128xf32>
    %13 = math.tanh %12 : vector<16x128xf32>
    %c0_11 = arith.constant 0 : index
    %c0_12 = arith.constant 0 : index
    %14 = vector.load %arg6[%c0_11, %c0_12] : memref<16x128xf32, #tpu.memory_space<vmem>>, vector<16x128xf32>
    tpu.vector_store %arg6[%c0_11, %c0_12], %13 {strides = array<i32>} : memref<16x128xf32, #tpu.memory_space<vmem>>, vector<16x128xf32>,
    return
  }
  func.func @transform_0(%arg0: i32) -> (i32, i32) {
    %c0_i32 = arith.constant 0 : i32
    %c0_i32_0 = arith.constant 0 : i32
    return %arg0, %c0_i32 : i32, i32
  }
  func.func @transform_1(%arg0: i32) -> (i32, i32) {
    %c0_i32 = arith.constant 0 : i32
    %c0_i32_0 = arith.constant 0 : i32
    %c0_i32_1 = arith.constant 0 : i32
    return %c0_i32, %c0_i32_0 : i32, i32
  }
  func.func @transform_2(%arg0: i32) -> (i32, i32) {
    %c0_i32 = arith.constant 0 : i32
    %c0_i32_0 = arith.constant 0 : i32
    %c0_i32_1 = arith.constant 0 : i32
    return %c0_i32, %c0_i32_0 : i32, i32
  }
  func.func @transform_3(%arg0: i32) -> (i32, i32) {
    %c0_i32 = arith.constant 0 : i32
    %c0_i32_0 = arith.constant 0 : i32
    %c0_i32_1 = arith.constant 0 : i32
    return %c0_i32, %c0_i32_0 : i32, i32
  }
  func.func @transform_4(%arg0: i32) -> (i32, i32) {
    %c0_i32 = arith.constant 0 : i32
    %c0_i32_0 = arith.constant 0 : i32
    %c0_i32_1 = arith.constant 0 : i32
    return %c0_i32, %c0_i32_0 : i32, i32
  }
  func.func @transform_5(%arg0: i32) -> (i32, i32) {
    %c0_i32 = arith.constant 0 : i32
    %c0_i32_0 = arith.constant 0 : i32
    return %arg0, %c0_i32 : i32, i32
  }
}

</mosaic_0001>

<llo_original>
// kernel: feedforward_forward.1
$region0: #{feedforward_forward.1}
  #allocation0 [shape = 'u32[]', space=smem, size = 0x4, offset = 0x4, fixed_abs, tag = 'smem constant byte address 0x4 - core index']
  #allocation1 [shape = 'u32[72,128]{1,0:T(1,128)}', space=vmem, size = 0x9000, scoped, tag = 'internal scratch']
  %s0 = inlined_call_operand.hbm [shape: f32[16,32], index: 0, kind: input, shape index: {}]
  %s1 = inlined_call_operand.hbm [shape: f32[32,128], index: 1, kind: input, shape index: {}]
  %s2 = inlined_call_operand.vmem [shape: f32[1,128], index: 2, kind: input, shape index: {}]
  %s3 = inlined_call_operand.hbm [shape: f32[128,128], index: 3, kind: input, shape index: {}]
  %s4 = inlined_call_operand.vmem [shape: f32[1,128], index: 4, kind: input, shape index: {}]
  %s5 = inlined_call_operand.vmem [shape: f32[16,128], index: 5, kind: output, shape index: {}]
  %s6 = sld [smem:[#allocation0]]
  $region42: #{feedforward_forward.1} parent=0
    _
  %s8 = ssub.s32 1, %s6
  %s9 = scalar_select 0, %s8, %s6
  $region1: #{feedforward_forward.1} parent=0
    #allocation2 [shape = 'u8[8192]{0}', space=vmem, size = 0x2000, scoped, tag = 'input window, operand 0, single buffered']
    #allocation3 [shape = 's32[1]{0}', space=sflag, size = 0x4, scoped, tag = 'scoped memory for feedforward_forward.1']
    #allocation4 [shape = 'u8[16384]{0}', space=vmem, size = 0x4000, scoped, tag = 'input window, operand 1, single buffered']
    #allocation5 [shape = 's32[1]{0}', space=sflag, size = 0x4, scoped, tag = 'scoped memory for feedforward_forward.1']
    #allocation6 [shape = 'u8[65536]{0}', space=vmem, size = 0x10000, scoped, tag = 'input window, operand 3, single buffered']
    %10 = vsyncpa [#allocation3], 0
    %11 = vsyncpa [#allocation5], 0
    // Predicated region
    $region2: #{feedforward_forward.1} parent=1 // pred_check
      _
    $region3: #{feedforward_forward.1} parent=1 // pred_check_branch
      %13 = sbr.rel (0) target = $region5
    $region4: #{feedforward_forward.1} parent=1 // pred_region
      %15 = vsyncadd [#allocation3], 0
      %s16 = sshll.u32 %s0, 4
      %s17 = int_to_ptr.hbm [resolvable:$true] %s16
      %s18 = sshll.u32 [#allocation2], 4
      %s19 = int_to_ptr.vmem [resolvable:$true] %s18
      %24 = dma.hbm_to_vmem [thread:$0]  %s17, 256, %s19, [#allocation3], 128, 128, 8
    $region5: #{feedforward_forward.1} parent=1 // pred_fallthru
      _
    // Predicated region
    $region6: #{feedforward_forward.1} parent=1 // pred_check
      _
    $region7: #{feedforward_forward.1} parent=1 // pred_check_branch
      %26 = sbr.rel (0) target = $region9
    $region8: #{feedforward_forward.1} parent=1 // pred_region
      %28 = vsyncadd [#allocation5], 0
      %s29 = sshll.u32 %s1, 4
      %s30 = int_to_ptr.hbm [resolvable:$true] %s29
      %s31 = sshll.u32 [#allocation4], 4
      %s32 = int_to_ptr.vmem [resolvable:$true] %s31
      %37 = dma.hbm_to_vmem [thread:$0]  %s30, 512, %s32, [#allocation5], 128, 128, 8
    $region9: #{feedforward_forward.1} parent=1 // pred_fallthru
      _
    // Predicated region
    $region10: #{feedforward_forward.1} parent=1 // pred_check
      _
    $region11: #{feedforward_forward.1} parent=1 // pred_check_branch
      %39 = sbr.rel (0) target = $region13
    $region12: #{feedforward_forward.1} parent=1 // pred_region
      _
    $region13: #{feedforward_forward.1} parent=1 // pred_fallthru
      _
    // Predicated region
    $region14: #{feedforward_forward.1} parent=1 // pred_check
      _
    $region15: #{feedforward_forward.1} parent=1 // pred_check_branch
      %41 = sbr.rel (0) target = $region17
    $region16: #{feedforward_forward.1} parent=1 // pred_region
      %43 = vsyncadd [#allocation5], 0
      %s44 = sshll.u32 %s3, 4
      %s45 = int_to_ptr.hbm [resolvable:$true] %s44
      %s46 = sshll.u32 [#allocation6], 4
      %s47 = int_to_ptr.vmem [resolvable:$true] %s46
      %52 = dma.hbm_to_vmem [thread:$0]  %s45, 2048, %s47, [#allocation5], 128, 128, 8
    $region17: #{feedforward_forward.1} parent=1 // pred_fallthru
      _
    // Predicated region
    $region18: #{feedforward_forward.1} parent=1 // pred_check
      _
    $region19: #{feedforward_forward.1} parent=1 // pred_check_branch
      %54 = sbr.rel (0) target = $region21
    $region20: #{feedforward_forward.1} parent=1 // pred_region
      _
    $region21: #{feedforward_forward.1} parent=1 // pred_fallthru
      _
    // Predicated region
    $region22: #{feedforward_forward.1} parent=1 // pred_check
      _
    $region23: #{feedforward_forward.1} parent=1 // pred_check_branch
      %56 = sbr.rel (0) target = $region25
    $region24: #{feedforward_forward.1} parent=1 // pred_region
      %58 = dma.done [#allocation3], 256
    $region25: #{feedforward_forward.1} parent=1 // pred_fallthru
      _
    // Predicated region
    $region26: #{feedforward_forward.1} parent=1 // pred_check
      _
    $region27: #{feedforward_forward.1} parent=1 // pred_check_branch
      %60 = sbr.rel (0) target = $region29
    $region28: #{feedforward_forward.1} parent=1 // pred_region
      %62 = dma.done [#allocation5], 512
    $region29: #{feedforward_forward.1} parent=1 // pred_fallthru
      _
    // Predicated region
    $region30: #{feedforward_forward.1} parent=1 // pred_check
      _
    $region31: #{feedforward_forward.1} parent=1 // pred_check_branch
      %64 = sbr.rel (0) target = $region33
    $region32: #{feedforward_forward.1} parent=1 // pred_region
      %66 = dma.done [#allocation5], 2048
    $region33: #{feedforward_forward.1} parent=1 // pred_fallthru
      _
    %v67 = vld [vmem:[#allocation2] sm:$0xff]
    %v68 = vld [vmem:[#allocation2 + $0x8] sm:$0xff]
    %v69 = vld [vmem:[#allocation4] sm:$0xff]
    %v70 = vld [vmem:[#allocation4 + $0x8] sm:$0xff]
    %v71 = vld [vmem:[#allocation4 + $0x10] sm:$0xff]
    %v72 = vld [vmem:[#allocation4 + $0x18] sm:$0xff]
    %v73 = vld [vmem:[%s2] sm:$0x1]
    %v75 = vperm.slane %v73, 0
    %vm77 = vcmask 261120
    %v79 = vsel %vm77, %v67, 0
    %v82 = vsel %vm77, %v68, 0
    %84 = vmatpush.msra.mxu0 0.0
    %85 = vmatpush.msra.mxu0 0.0
    %86 = vmatpush.msra.mxu0 0.0
    %87 = vmatpush.msra.mxu0 0.0
    %88 = vmatpush.msra.mxu0 0.0
    %89 = vmatpush.msra.mxu0 0.0
    %90 = vmatpush.msra.mxu0 0.0
    %91 = vmatpush.msra.mxu0 0.0
    %92 = vmatpush.msra.mxu0 0.0
    %93 = vmatpush.msra.mxu0 0.0
    %94 = vmatpush.msra.mxu0 0.0
    %95 = vmatpush.msra.mxu0 0.0
    %96 = vmatpush.msra.mxu0 %v72
    %97 = vmatpush.msra.mxu0 %v71
    %98 = vmatpush.msra.mxu0 %v70
    %99 = vmatpush.msra.mxu0 %v69
    %100 = vmatmul.f32.gmra.mxu0 %v79
    %v101 = vpop.f32.mrf.mxu0
    %v102 = vadd.f32 %v75, %v101
    %103 = vmatmul.f32.gmra.mxu0 %v82
    %v104 = vpop.f32.mrf.mxu0
    %v105 = vadd.f32 %v75, %v104
    %106 = vdwg.mxu0
    %v107 = vmax.f32 %v102, 0.0
    %v108 = vmax.f32 %v105, 0.0
    %v109 = vld [vmem:[#allocation6] sm:$0xff]
    %v110 = vld [vmem:[#allocation6 + $0x8] sm:$0xff]
    %v111 = vld [vmem:[#allocation6 + $0x10] sm:$0xff]
    %v112 = vld [vmem:[#allocation6 + $0x18] sm:$0xff]
    %v113 = vld [vmem:[#allocation6 + $0x20] sm:$0xff]
    %v114 = vld [vmem:[#allocation6 + $0x28] sm:$0xff]
    %v115 = vld [vmem:[#allocation6 + $0x30] sm:$0xff]
    %v116 = vld [vmem:[#allocation6 + $0x38] sm:$0xff]
    %v117 = vld [vmem:[#allocation6 + $0x40] sm:$0xff]
    %v118 = vld [vmem:[#allocation6 + $0x48] sm:$0xff]
    %v119 = vld [vmem:[#allocation6 + $0x50] sm:$0xff]
    %v120 = vld [vmem:[#allocation6 + $0x58] sm:$0xff]
    %v121 = vld [vmem:[#allocation6 + $0x60] sm:$0xff]
    %v122 = vld [vmem:[#allocation6 + $0x68] sm:$0xff]
    %v123 = vld [vmem:[#allocation6 + $0x70] sm:$0xff]
    %v124 = vld [vmem:[#allocation6 + $0x78] sm:$0xff]
    %v125 = vld [vmem:[%s4] sm:$0x1]
    %v127 = vperm.slane %v125, 0
    %129 = vmatpush.msra.mxu0 %v124
    %130 = vmatpush.msra.mxu0 %v123
    %131 = vmatpush.msra.mxu0 %v122
    %132 = vmatpush.msra.mxu0 %v121
    %133 = vmatpush.msra.mxu0 %v120
    %134 = vmatpush.msra.mxu0 %v119
    %135 = vmatpush.msra.mxu0 %v118
    %136 = vmatpush.msra.mxu0 %v117
    %137 = vmatpush.msra.mxu0 %v116
    %138 = vmatpush.msra.mxu0 %v115
    %139 = vmatpush.msra.mxu0 %v114
    %140 = vmatpush.msra.mxu0 %v113
    %141 = vmatpush.msra.mxu0 %v112
    %142 = vmatpush.msra.mxu0 %v111
    %143 = vmatpush.msra.mxu0 %v110
    %144 = vmatpush.msra.mxu0 %v109
    %145 = vmatmul.f32.gmra.mxu0 %v107
    %v146 = vpop.f32.mrf.mxu0
    %v147 = vadd.f32 %v127, %v146
    %148 = vmatmul.f32.gmra.mxu0 %v108
    %v149 = vpop.f32.mrf.mxu0
    %v150 = vadd.f32 %v127, %v149
    %151 = vdwg.mxu0
    %v152 = vtanh.pop %v147
    %v153 = vtanh.pop %v150
    %154 = vst [vmem:[%s5] sm:$0xff] %v152
    %155 = vst [vmem:[%s5 + $0x8] sm:$0xff] %v153
    // Predicated region
    $region34: #{feedforward_forward.1} parent=1 // pred_check
      _
    $region35: #{feedforward_forward.1} parent=1 // pred_check_branch
      %157 = sbr.rel (0) target = $region37
    $region36: #{feedforward_forward.1} parent=1 // pred_region
      _
    $region37: #{feedforward_forward.1} parent=1 // pred_fallthru
      _
    // Predicated region
    $region38: #{feedforward_forward.1} parent=1 // pred_check
      _
    $region39: #{feedforward_forward.1} parent=1 // pred_check_branch
      %159 = sbr.rel (0) target = $region41
    $region40: #{feedforward_forward.1} parent=1 // pred_region
      _
    $region41: #{feedforward_forward.1} parent=1 // pred_fallthru
      _
    %160 = vsyncpa [#allocation3], 1
    %161 = vsyncpa [#allocation5], 1

</llo_original>
